<compile_context>
chip_gen: v7x
topology: tpu7x:2x2x1
jax: 0.10.0
libtpu: 0.0.40
codegen_flags: <defaults>
</compile_context>

<pallas_src>
import functools

import jax
import jax.numpy as jnp
from jax.experimental import pallas as pl
from jax.experimental.pallas import tpu as pltpu


def _round_up(x, m):
    return ((x + m - 1) // m) * m


def _vmem_budget_bytes():
    """Per-TensorCore VMEM capacity (generation-aware, conservative fallback)."""
    try:
        info = pltpu.get_tpu_info()
        cap = int(getattr(info, "vmem_capacity_bytes", 0)) or 64 * 1024 * 1024
    except Exception:
        cap = 64 * 1024 * 1024  # v7x per-TC
    return cap


def _pick_tm(batch, tm_max):
    """Batch tile (multiple of 8) minimizing padded rows, preferring large tiles."""
    tm_max = max(8, (int(tm_max) // 8) * 8)
    b8 = _round_up(batch, 8)
    if b8 <= tm_max:
        return b8  # single tile covers the whole batch
    best_t, best_waste = 8, None
    for t in range(tm_max, 7, -8):  # scan downward -> largest tile wins ties
        waste = _round_up(batch, t) - batch
        if best_waste is None or waste < best_waste:
            best_t, best_waste = t, waste
        if waste == 0:
            break
    return best_t


# -----------------------------------------------------------------------------
# One-time parameter preparation (hoisted out of the per-call path).
# -----------------------------------------------------------------------------
def prepare_params(params, *, tile_k=512):
    """Pad + cast weights once.

    * every layer's output dim is zero-padded to a multiple of 128 (lane-dense
      matmuls and unmasked stores; mathematically exact — padding is zero),
    * weights are cast to bf16 for the MXU (f32 accumulation in-kernel),
    * biases stay f32, reshaped to (1, out_p),
    * W1's input dim stays unpadded when the weight stack fits VMEM (resident
      mode); otherwise it is padded to a multiple of `tile_k` for K-streaming.
    """
    n_layers = 0
    while f"w{n_layers + 1}" in params:
        n_layers += 1
    assert n_layers >= 1, "need at least the output Linear layer"

    d_feature = params["w1"].shape[0]
    out_dims = [params[f"w{i + 1}"].shape[1] for i in range(n_layers)]
    out_p = [_round_up(d, 128) for d in out_dims]

    # Residency decision: padded-weight footprint vs per-TC VMEM budget.
    w_bytes = d_feature * out_p[0] * 2
    for i in range(1, n_layers):
        w_bytes += out_p[i - 1] * out_p[i] * 2
    w_bytes += sum(out_p) * 4  # f32 biases
    vmem_cap = _vmem_budget_bytes()
    resident = w_bytes <= vmem_cap // 2  # leave half of VMEM for x/out tiles + temps

    dp = d_feature if resident else _round_up(d_feature, tile_k)

    prep = {
        "_prepared": True,
        "n_layers": n_layers,
        "d_feature": d_feature,
        "dp": dp,
        "n_labels": out_dims[-1],
        "out_p": tuple(out_p),
        "resident": resident,
        "weight_bytes": w_bytes,
        "tile_k": tile_k,
    }
    in_dims_p = [dp] + out_p[:-1]
    for i in range(n_layers):
        w = params[f"w{i + 1}"].astype(jnp.bfloat16)
        b = params[f"b{i + 1}"].astype(jnp.float32).reshape(1, -1)
        wp = jnp.zeros((in_dims_p[i], out_p[i]), jnp.bfloat16)
        wp = wp.at[: w.shape[0], : w.shape[1]].set(w)
        bp_ = jnp.zeros((1, out_p[i]), jnp.float32).at[:, : b.shape[1]].set(b)
        prep[f"w{i + 1}"] = wp
        prep[f"b{i + 1}"] = bp_
    return prep


# -----------------------------------------------------------------------------
# Kernels
# -----------------------------------------------------------------------------
def _mlp_layers(h, wb_refs, n_layers, start_layer=0):
    """Run layers [start_layer, n_layers) on a VMEM-resident activation block."""
    for li in range(start_layer, n_layers):
        w_ref, b_ref = wb_refs[2 * li], wb_refs[2 * li + 1]
        z = jnp.dot(h.astype(w_ref.dtype), w_ref[...],
                    preferred_element_type=jnp.float32) + b_ref[...]
        h = jnp.maximum(z, 0.0) if li < n_layers - 1 else jax.nn.sigmoid(z)
    return h


def _resident_kernel(n_layers, *refs):
    """grid = (batch_tiles,). All weights VMEM-resident (constant index maps)."""
    x_ref, o_ref = refs[0], refs[-1]
    wb = refs[1:-1]
    o_ref[...] = _mlp_layers(x_ref[...], wb, n_layers).astype(o_ref.dtype)


def _ktiled_kernel(n_layers, *refs):
    """grid = (batch_tiles, k_tiles). Layer-1 accumulates in f32 scratch."""
    x_ref, o_ref, acc_ref = refs[0], refs[-2], refs[-1]
    wb = refs[1:-2]
    k = pl.program_id(1)

    @pl.when(k == 0)
    def _():
        acc_ref[...] = jnp.zeros_like(acc_ref)

    acc_ref[...] += jnp.dot(x_ref[...].astype(wb[0].dtype), wb[0][...],
                            preferred_element_type=jnp.float32)

    @pl.when(k == pl.num_programs(1) - 1)
    def _():
        z = acc_ref[...] + wb[1][...]
        h = jnp.maximum(z, 0.0) if n_layers > 1 else jax.nn.sigmoid(z)
        h = _mlp_layers(h, wb, n_layers, start_layer=1)
        o_ref[...] = h.astype(o_ref.dtype)


# -----------------------------------------------------------------------------
# Wrapper
# -----------------------------------------------------------------------------
def label_cls_head(emb, prepared, *, tile_m=512):
    """Forward pass of LabelCLSHead.

    Args:
      emb: (batch_size, emb_len, d_model) embedding sequence.
      prepared: dict from `prepare_params` (raw params are also accepted and
        prepared on the fly, but pre-preparing avoids per-call pad/cast traffic).
      tile_m: max batch tile (multiple of 8; 512 keeps layer-1 compute-bound
        even when W1 must be streamed; 128-multiples are enough for v5e's MXU).

    Returns:
      y_pred: (batch_size, n_labels) float32 predictions in (0, 1).
    """
    if not (isinstance(prepared, dict) and prepared.get("_prepared", False)):
        prepared = prepare_params(prepared)

    b = emb.shape[0]
    x = emb.reshape(b, -1).astype(jnp.float32)  # nn.Flatten(start_dim=1, end_dim=-1)

    n_layers = prepared["n_layers"]
    d_feature = prepared["d_feature"]
    dp = prepared["dp"]
    n_labels = prepared["n_labels"]
    out_p = list(prepared["out_p"])
    nlp = out_p[-1]
    resident = prepared["resident"]
    tile_k = prepared["tile_k"]
    assert x.shape[1] == d_feature, "emb_len * d_model must equal d_feature"

    # --- generation-aware VMEM sizing --------------------------------------
    vmem_cap = _vmem_budget_bytes()
    vmem_limit = min(int(vmem_cap * 0.75), 100 * 1024 * 1024)  # ~48 MiB v7x, ~96 MiB v5e/v6e

    hidden_p = out_p[:-1]
    if resident:
        fixed = prepared["weight_bytes"]
        per_row = 4 * (2 * d_feature + 2 * nlp + sum(hidden_p)) + 2 * d_feature
    else:
        tk = min(tile_k, dp)
        fixed = (prepared["weight_bytes"] - dp * out_p[0] * 2   # W1 not resident
                 + 2 * tk * out_p[0] * 2)                       # 2x streamed W1 tile
        per_row = 4 * (2 * tk + 2 * nlp + sum(hidden_p) + out_p[0]) + 2 * tk
    avail = max(vmem_limit - fixed, 8 * per_row)
    tm_cap = max(8, min(1024, (avail // per_row) // 8 * 8))

    tm = _pick_tm(b, min(max(8, (tile_m // 8) * 8), tm_cap))
    bp = _round_up(b, tm)

    # --- activation: no bf16 copy; pad only what tiling requires ------------
    pad_rows = bp - b
    pad_cols = 0 if resident else (dp - d_feature)
    x_in = x if (pad_rows == 0 and pad_cols == 0) else jnp.pad(
        x, ((0, pad_rows), (0, pad_cols)))

    wb_args = []
    for i in range(n_layers):
        wb_args += [prepared[f"w{i + 1}"], prepared[f"b{i + 1}"]]

    layer_flops = 2 * bp * (dp * out_p[0]
                            + sum(out_p[i - 1] * out_p[i] for i in range(1, n_layers)))

    if resident:
        grid = (bp // tm,)
        in_specs = [pl.BlockSpec((tm, d_feature), lambda i: (i, 0))]  # x streams
        prev = d_feature
        for li in range(n_layers):
            in_specs.append(pl.BlockSpec((prev, out_p[li]), lambda i: (0, 0)))  # W resident
            in_specs.append(pl.BlockSpec((1, out_p[li]), lambda i: (0, 0)))     # b resident
            prev = out_p[li]
        out_spec = pl.BlockSpec((tm, nlp), lambda i: (i, 0))

        bytes_acc = bp * d_feature * 4 + prepared["weight_bytes"] + bp * nlp * 4
        cost = pl.CostEstimate(flops=int(layer_flops), transcendentals=int(bp * nlp),
                               bytes_accessed=int(bytes_acc))

        out = pl.pallas_call(
            functools.partial(_resident_kernel, n_layers),
            out_shape=jax.ShapeDtypeStruct((bp, nlp), jnp.float32),
            grid=grid,
            in_specs=in_specs,
            out_specs=out_spec,
            compiler_params=pltpu.CompilerParams(
                dimension_semantics=("parallel",),
                vmem_limit_bytes=vmem_limit),
            cost_estimate=cost,
        )(x_in, *wb_args)
    else:
        tk = min(tile_k, dp)
        grid = (bp // tm, dp // tk)
        in_specs = [pl.BlockSpec((tm, tk), lambda i, k: (i, k)),          # x streams
                    pl.BlockSpec((tk, out_p[0]), lambda i, k: (k, 0)),    # W1 streams over K
                    pl.BlockSpec((1, out_p[0]), lambda i, k: (0, 0))]     # b1 resident
        prev = out_p[0]
        for li in range(1, n_layers):
            in_specs.append(pl.BlockSpec((prev, out_p[li]), lambda i, k: (0, 0)))
            in_specs.append(pl.BlockSpec((1, out_p[li]), lambda i, k: (0, 0)))
            prev = out_p[li]
        out_spec = pl.BlockSpec((tm, nlp), lambda i, k: (i, 0))

        bytes_acc = (bp * dp * 4                                 # x (f32, streamed once)
                     + (bp // tm) * dp * out_p[0] * 2            # W1 re-streamed per batch tile
                     + (prepared["weight_bytes"] - dp * out_p[0] * 2)
                     + bp * nlp * 4)
        cost = pl.CostEstimate(flops=int(layer_flops), transcendentals=int(bp * nlp),
                               bytes_accessed=int(bytes_acc))

        out = pl.pallas_call(
            functools.partial(_ktiled_kernel, n_layers),
            out_shape=jax.ShapeDtypeStruct((bp, nlp), jnp.float32),
            grid=grid,
            in_specs=in_specs,
            out_specs=out_spec,
            scratch_shapes=[pltpu.VMEM((tm, out_p[0]), jnp.float32)],
            compiler_params=pltpu.CompilerParams(
                dimension_semantics=("parallel", "arbitrary"),
                vmem_limit_bytes=vmem_limit),
            cost_estimate=cost,
        )(x_in, *wb_args)

    return out[:b, :n_labels]


# -----------------------------------------------------------------------------
# Deterministic parameter init (matches nn.init.trunc_normal_(std=0.02) +
# zero bias). Weights are stored transposed relative to torch ((in, out)).
# -----------------------------------------------------------------------------
def init_params(key, d_feature, d_hidden, n_labels):
    dims = [d_feature] + list(d_hidden) + [n_labels]
    params = {}
    std = 0.02
    lo, hi = -2.0 / std, 2.0 / std
    keys = jax.random.split(key, len(dims) - 1)
    for i in range(len(dims) - 1):
        w = jax.random.truncated_normal(
            keys[i], lo, hi, (dims[i], dims[i + 1]), dtype=jnp.float32) * std
        params[f"w{i + 1}"] = w
        params[f"b{i + 1}"] = jnp.zeros((dims[i + 1],), dtype=jnp.float32)
    return params


# -----------------------------------------------------------------------------
# Pure-JAX reference for sanity checking
# -----------------------------------------------------------------------------
def label_cls_head_ref(emb, p):
    x = emb.reshape(emb.shape[0], -1)
    h = x
    n_layers = 0
    while f"w{n_layers + 1}" in p:
        n_layers += 1
    for i in range(n_layers):
        z = h @ p[f"w{i + 1}"] + p[f"b{i + 1}"]
        h = jnp.maximum(z, 0.0) if i < n_layers - 1 else jax.nn.sigmoid(z)
    return h


if __name__ == "__main__":
    # Small shapes consistent with forward(emb: (batch_size, emb_len, d_model)).
    batch_size, emb_len, d_model = 2, 8, 32
    d_feature = emb_len * d_model          # = 256 after Flatten
    d_hidden = [128, 64]
    n_labels = 8
    # params.dropout = 0.0 -> no Dropout layer appended

    key = jax.random.PRNGKey(0)
    k_emb, k_par = jax.random.split(key)

    emb = jax.random.normal(k_emb, (batch_size, emb_len, d_model), dtype=jnp.float32)
    params = init_params(k_par, d_feature, d_hidden, n_labels)

    # Pad/cast weights ONCE (hoisted out of the per-call path).
    prepared = prepare_params(params)

    y_pred = label_cls_head(emb, prepared)
    y_pred = jax.block_until_ready(y_pred)

    y_ref = label_cls_head_ref(emb, params)
    assert y_pred.shape == (batch_size, n_labels)
    # bf16 matmul operands with f32 accumulation -> slightly looser tolerance.
    assert jnp.allclose(y_pred, y_ref, atol=1e-2, rtol=1e-2), (
        float(jnp.max(jnp.abs(y_pred - y_ref))))

    print("KERNEL_OK")
</pallas_src>

<mosaic_0001>
module attributes {stable_mosaic.version = 11 : i64} {
  func.func @_resident_kernel(%arg0: i32, %arg1: memref<8x256xf32, #tpu.memory_space<vmem>>, %arg2: memref<256x128xbf16, #tpu.memory_space<vmem>>, %arg3: memref<1x128xf32, #tpu.memory_space<vmem>>, %arg4: memref<128x128xbf16, #tpu.memory_space<vmem>>, %arg5: memref<1x128xf32, #tpu.memory_space<vmem>>, %arg6: memref<128x128xbf16, #tpu.memory_space<vmem>>, %arg7: memref<1x128xf32, #tpu.memory_space<vmem>>, %arg8: memref<8x128xf32, #tpu.memory_space<vmem>>) attributes {dimension_semantics = [#tpu.dimension_semantics<parallel>], iteration_bounds = array<i64: 1>, scalar_prefetch = 0 : i64, scratch_operands = 0 : i64, tpu.core_type = #tpu.core_type<tc>, window_params = [{transform_indices = @transform_0, window_bounds = array<i64: 8, 256>}, {pipeline_mode = #tpu.pipeline_mode<synchronous>, transform_indices = @transform_1, window_bounds = array<i64: 256, 128>}, {pipeline_mode = #tpu.pipeline_mode<synchronous>, transform_indices = @transform_2, window_bounds = array<i64: 1, 128>}, {pipeline_mode = #tpu.pipeline_mode<synchronous>, transform_indices = @transform_3, window_bounds = array<i64: 128, 128>}, {pipeline_mode = #tpu.pipeline_mode<synchronous>, transform_indices = @transform_4, window_bounds = array<i64: 1, 128>}, {pipeline_mode = #tpu.pipeline_mode<synchronous>, transform_indices = @transform_5, window_bounds = array<i64: 128, 128>}, {pipeline_mode = #tpu.pipeline_mode<synchronous>, transform_indices = @transform_6, window_bounds = array<i64: 1, 128>}, {transform_indices = @transform_7, window_bounds = array<i64: 8, 128>}]} {
    %c0 = arith.constant 0 : index
    %c0_0 = arith.constant 0 : index
    %0 = vector.load %arg1[%c0, %c0_0] : memref<8x256xf32, #tpu.memory_space<vmem>>, vector<8x256xf32>
    %1 = arith.truncf %0 : vector<8x256xf32> to vector<8x256xbf16>
    %c0_1 = arith.constant 0 : index
    %c0_2 = arith.constant 0 : index
    %2 = vector.load %arg2[%c0_1, %c0_2] : memref<256x128xbf16, #tpu.memory_space<vmem>>, vector<256x128xbf16>
    %cst = arith.constant dense<0.000000e+00> : vector<8x128xf32>
    %3 = tpu.matmul %1, %2, %cst {dimension_numbers = #tpu.dot_dimension_numbers<[1], [0], [0], [1], [0, 0, 1, 1], [], []>} : vector<8x256xbf16>, vector<256x128xbf16>, vector<8x128xf32> -> vector<8x128xf32>
    %c0_3 = arith.constant 0 : index
    %c0_4 = arith.constant 0 : index
    %4 = vector.load %arg3[%c0_3, %c0_4] : memref<1x128xf32, #tpu.memory_space<vmem>>, vector<1x128xf32>
    %5 = vector.broadcast %4 : vector<1x128xf32> to vector<8x128xf32>
    %6 = arith.addf %3, %5 : vector<8x128xf32>
    %cst_5 = arith.constant 0.000000e+00 : f32
    %7 = vector.broadcast %cst_5 : f32 to vector<8x128xf32>
    %8 = arith.maximumf %6, %7 : vector<8x128xf32>
    %9 = arith.truncf %8 : vector<8x128xf32> to vector<8x128xbf16>
    %c0_6 = arith.constant 0 : index
    %c0_7 = arith.constant 0 : index
    %10 = vector.load %arg4[%c0_6, %c0_7] : memref<128x128xbf16, #tpu.memory_space<vmem>>, vector<128x128xbf16>
    %cst_8 = arith.constant dense<0.000000e+00> : vector<8x128xf32>
    %11 = tpu.matmul %9, %10, %cst_8 {dimension_numbers = #tpu.dot_dimension_numbers<[1], [0], [0], [1], [0, 0, 1, 1], [], []>} : vector<8x128xbf16>, vector<128x128xbf16>, vector<8x128xf32> -> vector<8x128xf32>
    %c0_9 = arith.constant 0 : index
    %c0_10 = arith.constant 0 : index
    %12 = vector.load %arg5[%c0_9, %c0_10] : memref<1x128xf32, #tpu.memory_space<vmem>>, vector<1x128xf32>
    %13 = vector.broadcast %12 : vector<1x128xf32> to vector<8x128xf32>
    %14 = arith.addf %11, %13 : vector<8x128xf32>
    %cst_11 = arith.constant 0.000000e+00 : f32
    %15 = vector.broadcast %cst_11 : f32 to vector<8x128xf32>
    %16 = arith.maximumf %14, %15 : vector<8x128xf32>
    %17 = arith.truncf %16 : vector<8x128xf32> to vector<8x128xbf16>
    %c0_12 = arith.constant 0 : index
    %c0_13 = arith.constant 0 : index
    %18 = vector.load %arg6[%c0_12, %c0_13] : memref<128x128xbf16, #tpu.memory_space<vmem>>, vector<128x128xbf16>
    %cst_14 = arith.constant dense<0.000000e+00> : vector<8x128xf32>
    %19 = tpu.matmul %17, %18, %cst_14 {dimension_numbers = #tpu.dot_dimension_numbers<[1], [0], [0], [1], [0, 0, 1, 1], [], []>} : vector<8x128xbf16>, vector<128x128xbf16>, vector<8x128xf32> -> vector<8x128xf32>
    %c0_15 = arith.constant 0 : index
    %c0_16 = arith.constant 0 : index
    %20 = vector.load %arg7[%c0_15, %c0_16] : memref<1x128xf32, #tpu.memory_space<vmem>>, vector<1x128xf32>
    %21 = vector.broadcast %20 : vector<1x128xf32> to vector<8x128xf32>
    %22 = arith.addf %19, %21 : vector<8x128xf32>
    %23 = arith.negf %22 : vector<8x128xf32>
    %24 = math.exp %23 : vector<8x128xf32>
    %cst_17 = arith.constant 1.000000e+00 : f32
    %25 = vector.broadcast %cst_17 : f32 to vector<8x128xf32>
    %26 = arith.addf %25, %24 : vector<8x128xf32>
    %27 = arith.divf %25, %26 : vector<8x128xf32>
    %c0_18 = arith.constant 0 : index
    %c0_19 = arith.constant 0 : index
    %28 = vector.load %arg8[%c0_18, %c0_19] : memref<8x128xf32, #tpu.memory_space<vmem>>, vector<8x128xf32>
    tpu.vector_store %arg8[%c0_18, %c0_19], %27 {strides = array<i32>} : memref<8x128xf32, #tpu.memory_space<vmem>>, vector<8x128xf32>,
    return
  }
  func.func @transform_0(%arg0: i32) -> (i32, i32) {
    %c0_i32 = arith.constant 0 : i32
    %c0_i32_0 = arith.constant 0 : i32
    return %arg0, %c0_i32 : i32, i32
  }
  func.func @transform_1(%arg0: i32) -> (i32, i32) {
    %c0_i32 = arith.constant 0 : i32
    %c0_i32_0 = arith.constant 0 : i32
    %c0_i32_1 = arith.constant 0 : i32
    return %c0_i32, %c0_i32_0 : i32, i32
  }
  func.func @transform_2(%arg0: i32) -> (i32, i32) {
    %c0_i32 = arith.constant 0 : i32
    %c0_i32_0 = arith.constant 0 : i32
    %c0_i32_1 = arith.constant 0 : i32
    return %c0_i32, %c0_i32_0 : i32, i32
  }
  func.func @transform_3(%arg0: i32) -> (i32, i32) {
    %c0_i32 = arith.constant 0 : i32
    %c0_i32_0 = arith.constant 0 : i32
    %c0_i32_1 = arith.constant 0 : i32
    return %c0_i32, %c0_i32_0 : i32, i32
  }
  func.func @transform_4(%arg0: i32) -> (i32, i32) {
    %c0_i32 = arith.constant 0 : i32
    %c0_i32_0 = arith.constant 0 : i32
    %c0_i32_1 = arith.constant 0 : i32
    return %c0_i32, %c0_i32_0 : i32, i32
  }
  func.func @transform_5(%arg0: i32) -> (i32, i32) {
    %c0_i32 = arith.constant 0 : i32
    %c0_i32_0 = arith.constant 0 : i32
    %c0_i32_1 = arith.constant 0 : i32
    return %c0_i32, %c0_i32_0 : i32, i32
  }
  func.func @transform_6(%arg0: i32) -> (i32, i32) {
    %c0_i32 = arith.constant 0 : i32
    %c0_i32_0 = arith.constant 0 : i32
    %c0_i32_1 = arith.constant 0 : i32
    return %c0_i32, %c0_i32_0 : i32, i32
  }
  func.func @transform_7(%arg0: i32) -> (i32, i32) {
    %c0_i32 = arith.constant 0 : i32
    %c0_i32_0 = arith.constant 0 : i32
    return %arg0, %c0_i32 : i32, i32
  }
}

</mosaic_0001>

<llo_original>
// kernel: tpu_custom_call.1
$region0: #{tpu_custom_call.1}
  #allocation0 [shape = 'u32[]', space=smem, size = 0x4, offset = 0x4, fixed_abs, tag = 'smem constant byte address 0x4 - core index']
  #allocation1 [shape = 'u32[144,128]{1,0:T(1,128)}', space=vmem, size = 0x12000, scoped, tag = 'internal scratch']
  %s0 = inlined_call_operand.hbm [shape: f32[8,256], index: 0, kind: input, shape index: {}]
  %s1 = inlined_call_operand.hbm [shape: bf16[256,128], index: 1, kind: input, shape index: {}]
  %s2 = inlined_call_operand.vmem [shape: f32[1,128], index: 2, kind: input, shape index: {}]
  %s3 = inlined_call_operand.hbm [shape: bf16[128,128], index: 3, kind: input, shape index: {}]
  %s4 = inlined_call_operand.vmem [shape: f32[1,128], index: 4, kind: input, shape index: {}]
  %s5 = inlined_call_operand.hbm [shape: bf16[128,128], index: 5, kind: input, shape index: {}]
  %s6 = inlined_call_operand.vmem [shape: f32[1,128], index: 6, kind: input, shape index: {}]
  %s7 = inlined_call_operand.hbm [shape: f32[8,128], index: 7, kind: output, shape index: {}]
  %s8 = sld [smem:[#allocation0]]
  $region54: #{tpu_custom_call.1} parent=0
    _
  %s10 = ssub.s32 1, %s8
  %s11 = scalar_select 0, %s10, %s8
  $region1: #{tpu_custom_call.1} parent=0
    #allocation2 [shape = 'u8[8192]{0}', space=vmem, size = 0x2000, scoped, tag = 'input window, operand 0, single buffered']
    #allocation3 [shape = 's32[1]{0}', space=sflag, size = 0x4, scoped, tag = 'scoped memory for tpu_custom_call.1']
    #allocation4 [shape = 's32[1]{0}', space=sflag, size = 0x4, scoped, tag = 'scoped memory for tpu_custom_call.1']
    #allocation5 [shape = 'u8[65536]{0}', space=vmem, size = 0x10000, scoped, tag = 'input window, operand 1, single buffered']
    #allocation6 [shape = 's32[1]{0}', space=sflag, size = 0x4, scoped, tag = 'scoped memory for tpu_custom_call.1']
    #allocation7 [shape = 'u8[32768]{0}', space=vmem, size = 0x8000, scoped, tag = 'input window, operand 3, single buffered']
    #allocation8 [shape = 'u8[32768]{0}', space=vmem, size = 0x8000, scoped, tag = 'input window, operand 5, single buffered']
    #allocation9 [shape = 's32[1]{0}', space=sflag, size = 0x4, scoped, tag = 'scoped memory for tpu_custom_call.1']
    #allocation10 [shape = 'u8[4096]{0}', space=vmem, size = 0x1000, scoped, tag = 'output window, operand 0, single buffered']
    %12 = vsyncpa [#allocation3], 0
    %13 = vsyncpa [#allocation6], 0
    %14 = vsyncpa [#allocation9], 0
    %15 = vsyncpa [#allocation4], 0
    // Predicated region
    $region2: #{tpu_custom_call.1} parent=1 // pred_check
      _
    $region3: #{tpu_custom_call.1} parent=1 // pred_check_branch
      %17 = sbr.rel (0) target = $region5
    $region4: #{tpu_custom_call.1} parent=1 // pred_region
      %s19 = ssub.s32 256, 256
      %20 = vsyncadd [#allocation3], %s19
      %s22 = sshll.u32 [#allocation2], 4
      %s23 = int_to_ptr.vmem [resolvable:$true] %s22
      %25 = dma.hbm_to_vmem [thread:$0]  %s0, 256, %s23, [#allocation3]
    $region5: #{tpu_custom_call.1} parent=1 // pred_fallthru
      _
    // Predicated region
    $region6: #{tpu_custom_call.1} parent=1 // pred_check
      _
    $region7: #{tpu_custom_call.1} parent=1 // pred_check_branch
      %27 = sbr.rel (0) target = $region9
    $region8: #{tpu_custom_call.1} parent=1 // pred_region
      %s29 = ssub.s32 2048, 2048
      %30 = vsyncadd [#allocation6], %s29
      %s31 = sshll.u32 [#allocation5], 4
      %s32 = int_to_ptr.vmem [resolvable:$true] %s31
      %37 = dma.hbm_to_vmem [thread:$0]  %s1, 2048, %s32, [#allocation6], 64, 64, 4
    $region9: #{tpu_custom_call.1} parent=1 // pred_fallthru
      _
    // Predicated region
    $region10: #{tpu_custom_call.1} parent=1 // pred_check
      _
    $region11: #{tpu_custom_call.1} parent=1 // pred_check_branch
      %39 = sbr.rel (0) target = $region13
    $region12: #{tpu_custom_call.1} parent=1 // pred_region
      _
    $region13: #{tpu_custom_call.1} parent=1 // pred_fallthru
      _
    // Predicated region
    $region14: #{tpu_custom_call.1} parent=1 // pred_check
      _
    $region15: #{tpu_custom_call.1} parent=1 // pred_check_branch
      %41 = sbr.rel (0) target = $region17
    $region16: #{tpu_custom_call.1} parent=1 // pred_region
      %s43 = ssub.s32 1024, 1024
      %44 = vsyncadd [#allocation6], %s43
      %s45 = sshll.u32 [#allocation7], 4
      %s46 = int_to_ptr.vmem [resolvable:$true] %s45
      %51 = dma.hbm_to_vmem [thread:$0]  %s3, 1024, %s46, [#allocation6], 64, 64, 4
    $region17: #{tpu_custom_call.1} parent=1 // pred_fallthru
      _
    // Predicated region
    $region18: #{tpu_custom_call.1} parent=1 // pred_check
      _
    $region19: #{tpu_custom_call.1} parent=1 // pred_check_branch
      %53 = sbr.rel (0) target = $region21
    $region20: #{tpu_custom_call.1} parent=1 // pred_region
      _
    $region21: #{tpu_custom_call.1} parent=1 // pred_fallthru
      _
    // Predicated region
    $region22: #{tpu_custom_call.1} parent=1 // pred_check
      _
    $region23: #{tpu_custom_call.1} parent=1 // pred_check_branch
      %55 = sbr.rel (0) target = $region25
    $region24: #{tpu_custom_call.1} parent=1 // pred_region
      %s57 = ssub.s32 1024, 1024
      %58 = vsyncadd [#allocation9], %s57
      %s59 = sshll.u32 [#allocation8], 4
      %s60 = int_to_ptr.vmem [resolvable:$true] %s59
      %65 = dma.hbm_to_vmem [thread:$0]  %s5, 1024, %s60, [#allocation9], 64, 64, 4
    $region25: #{tpu_custom_call.1} parent=1 // pred_fallthru
      _
    // Predicated region
    $region26: #{tpu_custom_call.1} parent=1 // pred_check
      _
    $region27: #{tpu_custom_call.1} parent=1 // pred_check_branch
      %67 = sbr.rel (0) target = $region29
    $region28: #{tpu_custom_call.1} parent=1 // pred_region
      _
    $region29: #{tpu_custom_call.1} parent=1 // pred_fallthru
      _
    // Predicated region
    $region30: #{tpu_custom_call.1} parent=1 // pred_check
      _
    $region31: #{tpu_custom_call.1} parent=1 // pred_check_branch
      %69 = sbr.rel (0) target = $region33
    $region32: #{tpu_custom_call.1} parent=1 // pred_region
      %70 = dma.done [#allocation3], 256
    $region33: #{tpu_custom_call.1} parent=1 // pred_fallthru
      _
    // Predicated region
    $region34: #{tpu_custom_call.1} parent=1 // pred_check
      _
    $region35: #{tpu_custom_call.1} parent=1 // pred_check_branch
      %72 = sbr.rel (0) target = $region37
    $region36: #{tpu_custom_call.1} parent=1 // pred_region
      %73 = dma.done [#allocation6], 2048
    $region37: #{tpu_custom_call.1} parent=1 // pred_fallthru
      _
    // Predicated region
    $region38: #{tpu_custom_call.1} parent=1 // pred_check
      _
    $region39: #{tpu_custom_call.1} parent=1 // pred_check_branch
      %75 = sbr.rel (0) target = $region41
    $region40: #{tpu_custom_call.1} parent=1 // pred_region
      %76 = dma.done [#allocation6], 1024
    $region41: #{tpu_custom_call.1} parent=1 // pred_fallthru
      _
    // Predicated region
    $region42: #{tpu_custom_call.1} parent=1 // pred_check
      _
    $region43: #{tpu_custom_call.1} parent=1 // pred_check_branch
      %78 = sbr.rel (0) target = $region45
    $region44: #{tpu_custom_call.1} parent=1 // pred_region
      %79 = dma.done [#allocation9], 1024
    $region45: #{tpu_custom_call.1} parent=1 // pred_fallthru
      _
    %v81 = vld [vmem:[#allocation2] sm:$0xff]
    %v82 = vld [vmem:[#allocation2 + $0x8] sm:$0xff]
    %v83 = vpack.c.bf16 %v81, %v81
    %v84 = vpack.c.bf16 %v82, %v82
    %v85 = vld [vmem:[#allocation5] sm:$0xf]
    %v86 = vld [vmem:[#allocation5 + $0x4] sm:$0xf]
    %v87 = vld [vmem:[#allocation5 + $0x8] sm:$0xf]
    %v88 = vld [vmem:[#allocation5 + $0xc] sm:$0xf]
    %v89 = vld [vmem:[#allocation5 + $0x10] sm:$0xf]
    %v90 = vld [vmem:[#allocation5 + $0x14] sm:$0xf]
    %v91 = vld [vmem:[#allocation5 + $0x18] sm:$0xf]
    %v92 = vld [vmem:[#allocation5 + $0x1c] sm:$0xf]
    %v93 = vld [vmem:[#allocation5 + $0x20] sm:$0xf]
    %v94 = vld [vmem:[#allocation5 + $0x24] sm:$0xf]
    %v95 = vld [vmem:[#allocation5 + $0x28] sm:$0xf]
    %v96 = vld [vmem:[#allocation5 + $0x2c] sm:$0xf]
    %v97 = vld [vmem:[#allocation5 + $0x30] sm:$0xf]
    %v98 = vld [vmem:[#allocation5 + $0x34] sm:$0xf]
    %v99 = vld [vmem:[#allocation5 + $0x38] sm:$0xf]
    %v100 = vld [vmem:[#allocation5 + $0x3c] sm:$0xf]
    %v101 = vld [vmem:[#allocation5 + $0x40] sm:$0xf]
    %v102 = vld [vmem:[#allocation5 + $0x44] sm:$0xf]
    %v103 = vld [vmem:[#allocation5 + $0x48] sm:$0xf]
    %v104 = vld [vmem:[#allocation5 + $0x4c] sm:$0xf]
    %v105 = vld [vmem:[#allocation5 + $0x50] sm:$0xf]
    %v106 = vld [vmem:[#allocation5 + $0x54] sm:$0xf]
    %v107 = vld [vmem:[#allocation5 + $0x58] sm:$0xf]
    %v108 = vld [vmem:[#allocation5 + $0x5c] sm:$0xf]
    %v109 = vld [vmem:[#allocation5 + $0x60] sm:$0xf]
    %v110 = vld [vmem:[#allocation5 + $0x64] sm:$0xf]
    %v111 = vld [vmem:[#allocation5 + $0x68] sm:$0xf]
    %v112 = vld [vmem:[#allocation5 + $0x6c] sm:$0xf]
    %v113 = vld [vmem:[#allocation5 + $0x70] sm:$0xf]
    %v114 = vld [vmem:[#allocation5 + $0x74] sm:$0xf]
    %v115 = vld [vmem:[#allocation5 + $0x78] sm:$0xf]
    %v116 = vld [vmem:[#allocation5 + $0x7c] sm:$0xf]
    %v117 = vld [vmem:[%s2] sm:$0x1]
    %v119 = vlaneseq
    %v120 = vshrl.u32 %v119, 7
    %v121 = vsub.s32 0, %v120
    %v122 = vrot.slane %v117, %v121
    %v156 = vunpack.c.l.b16 %v85
    %v157 = vunpack.c.l.b16 %v86
    %v158 = vunpack.c.l.b16 %v87
    %v159 = vunpack.c.l.b16 %v88
    %v160 = vunpack.c.l.b16 %v89
    %v161 = vunpack.c.l.b16 %v90
    %v162 = vunpack.c.l.b16 %v91
    %v163 = vunpack.c.l.b16 %v92
    %v164 = vunpack.c.l.b16 %v93
    %v165 = vunpack.c.l.b16 %v94
    %v166 = vunpack.c.l.b16 %v95
    %v167 = vunpack.c.l.b16 %v96
    %v168 = vunpack.c.l.b16 %v97
    %v169 = vunpack.c.l.b16 %v98
    %v170 = vunpack.c.l.b16 %v99
    %v171 = vunpack.c.l.b16 %v100
    %v172 = vunpack.c.l.b16 %v101
    %v173 = vunpack.c.l.b16 %v102
    %v174 = vunpack.c.l.b16 %v103
    %v175 = vunpack.c.l.b16 %v104
    %v176 = vunpack.c.l.b16 %v105
    %v177 = vunpack.c.l.b16 %v106
    %v178 = vunpack.c.l.b16 %v107
    %v179 = vunpack.c.l.b16 %v108
    %v180 = vunpack.c.l.b16 %v109
    %v181 = vunpack.c.l.b16 %v110
    %v182 = vunpack.c.l.b16 %v111
    %v183 = vunpack.c.l.b16 %v112
    %v184 = vunpack.c.l.b16 %v113
    %v185 = vunpack.c.l.b16 %v114
    %v186 = vunpack.c.l.b16 %v115
    %v187 = vunpack.c.l.b16 %v116
    %v188 = vpack.c.b16 %v157, %v156
    %v189 = vpack.c.b16 %v159, %v158
    %v190 = vpack.c.b16 %v161, %v160
    %v191 = vpack.c.b16 %v163, %v162
    %v192 = vpack.c.b16 %v165, %v164
    %v193 = vpack.c.b16 %v167, %v166
    %v194 = vpack.c.b16 %v169, %v168
    %v195 = vpack.c.b16 %v171, %v170
    %v196 = vpack.c.b16 %v173, %v172
    %v197 = vpack.c.b16 %v175, %v174
    %v198 = vpack.c.b16 %v177, %v176
    %v199 = vpack.c.b16 %v179, %v178
    %v200 = vpack.c.b16 %v181, %v180
    %v201 = vpack.c.b16 %v183, %v182
    %v202 = vpack.c.b16 %v185, %v184
    %v203 = vpack.c.b16 %v187, %v186
    %220 = vmatprep.subr.bf16.mxu0 0
    %221 = vmatpush1.bf16.msra.mxu0 %v188
    %222 = vmatprep.subr.bf16.mxu0 0
    %223 = vmatpush1.bf16.msra.mxu0 %v189
    %224 = vmatprep.subr.bf16.mxu0 0
    %225 = vmatpush1.bf16.msra.mxu0 %v190
    %226 = vmatprep.subr.bf16.mxu0 0
    %227 = vmatpush1.bf16.msra.mxu0 %v191
    %228 = vmatprep.subr.bf16.mxu0 0
    %229 = vmatpush1.bf16.msra.mxu0 %v192
    %230 = vmatprep.subr.bf16.mxu0 0
    %231 = vmatpush1.bf16.msra.mxu0 %v193
    %232 = vmatprep.subr.bf16.mxu0 0
    %233 = vmatpush1.bf16.msra.mxu0 %v194
    %234 = vmatprep.subr.bf16.mxu0 0
    %235 = vmatpush1.bf16.msra.mxu0 %v195
    %236 = vmatprep.subr.bf16.mxu0 0
    %237 = vmatpush1.bf16.msra.mxu0 %v196
    %238 = vmatprep.subr.bf16.mxu0 0
    %239 = vmatpush1.bf16.msra.mxu0 %v197
    %240 = vmatprep.subr.bf16.mxu0 0
    %241 = vmatpush1.bf16.msra.mxu0 %v198
    %242 = vmatprep.subr.bf16.mxu0 0
    %243 = vmatpush1.bf16.msra.mxu0 %v199
    %244 = vmatprep.subr.bf16.mxu0 0
    %245 = vmatpush1.bf16.msra.mxu0 %v200
    %246 = vmatprep.subr.bf16.mxu0 0
    %247 = vmatpush1.bf16.msra.mxu0 %v201
    %248 = vmatprep.subr.bf16.mxu0 0
    %249 = vmatpush1.bf16.msra.mxu0 %v202
    %250 = vmatprep.subr.bf16.mxu0 0
    %251 = vmatpush1.bf16.msra.mxu0 %v203
    %252 = vmatprep.mubr.bf16.mxu0 %v84
    %253 = vmatmul.mubr.bf16.gmra.mrb[0].mxu0 %v83
    %v254 = vpop.f32.mrb[0].mxu0
    %v255 = vadd.f32 %v122, %v254
    %v256 = vpop.f32.mrb[0].mxu0
    %v257 = vpop.f32.mrb[0].mxu0
    %v258 = vpop.f32.mrb[0].mxu0
    %259 = vdwg.mxu0
    %v260 = vmax.f32 %v255, 0.0
    %v261 = vpack.c.bf16 %v260, %v260
    %v262 = vld [vmem:[#allocation7] sm:$0xf]
    %v263 = vld [vmem:[#allocation7 + $0x4] sm:$0xf]
    %v264 = vld [vmem:[#allocation7 + $0x8] sm:$0xf]
    %v265 = vld [vmem:[#allocation7 + $0xc] sm:$0xf]
    %v266 = vld [vmem:[#allocation7 + $0x10] sm:$0xf]
    %v267 = vld [vmem:[#allocation7 + $0x14] sm:$0xf]
    %v268 = vld [vmem:[#allocation7 + $0x18] sm:$0xf]
    %v269 = vld [vmem:[#allocation7 + $0x1c] sm:$0xf]
    %v270 = vld [vmem:[#allocation7 + $0x20] sm:$0xf]
    %v271 = vld [vmem:[#allocation7 + $0x24] sm:$0xf]
    %v272 = vld [vmem:[#allocation7 + $0x28] sm:$0xf]
    %v273 = vld [vmem:[#allocation7 + $0x2c] sm:$0xf]
    %v274 = vld [vmem:[#allocation7 + $0x30] sm:$0xf]
    %v275 = vld [vmem:[#allocation7 + $0x34] sm:$0xf]
    %v276 = vld [vmem:[#allocation7 + $0x38] sm:$0xf]
    %v277 = vld [vmem:[#allocation7 + $0x3c] sm:$0xf]
    %v278 = vld [vmem:[%s4] sm:$0x1]
    %v280 = vlaneseq
    %v281 = vshrl.u32 %v280, 7
    %v282 = vsub.s32 0, %v281
    %v283 = vrot.slane %v278, %v282
    %v301 = vunpack.c.l.b16 %v262
    %v302 = vunpack.c.l.b16 %v263
    %v303 = vunpack.c.l.b16 %v264
    %v304 = vunpack.c.l.b16 %v265
    %v305 = vunpack.c.l.b16 %v266
    %v306 = vunpack.c.l.b16 %v267
    %v307 = vunpack.c.l.b16 %v268
    %v308 = vunpack.c.l.b16 %v269
    %v309 = vunpack.c.l.b16 %v270
    %v310 = vunpack.c.l.b16 %v271
    %v311 = vunpack.c.l.b16 %v272
    %v312 = vunpack.c.l.b16 %v273
    %v313 = vunpack.c.l.b16 %v274
    %v314 = vunpack.c.l.b16 %v275
    %v315 = vunpack.c.l.b16 %v276
    %v316 = vunpack.c.l.b16 %v277
    %v317 = vpack.c.b16 %v302, %v301
    %v318 = vpack.c.b16 %v304, %v303
    %v319 = vpack.c.b16 %v306, %v305
    %v320 = vpack.c.b16 %v308, %v307
    %v321 = vpack.c.b16 %v310, %v309
    %v322 = vpack.c.b16 %v312, %v311
    %v323 = vpack.c.b16 %v314, %v313
    %v324 = vpack.c.b16 %v316, %v315
    %333 = vmatprep.subr.bf16.mxu0 0
    %334 = vmatpush1.bf16.msra.mxu0 %v317
    %335 = vmatprep.subr.bf16.mxu0 0
    %336 = vmatpush1.bf16.msra.mxu0 %v318
    %337 = vmatprep.subr.bf16.mxu0 0
    %338 = vmatpush1.bf16.msra.mxu0 %v319
    %339 = vmatprep.subr.bf16.mxu0 0
    %340 = vmatpush1.bf16.msra.mxu0 %v320
    %341 = vmatprep.subr.bf16.mxu0 0
    %342 = vmatpush1.bf16.msra.mxu0 %v321
    %343 = vmatprep.subr.bf16.mxu0 0
    %344 = vmatpush1.bf16.msra.mxu0 %v322
    %345 = vmatprep.subr.bf16.mxu0 0
    %346 = vmatpush1.bf16.msra.mxu0 %v323
    %347 = vmatprep.subr.bf16.mxu0 0
    %348 = vmatpush1.bf16.msra.mxu0 %v324
    %349 = vmatprep.subr.bf16.mxu0 0
    %350 = vmatpush1.bf16.msra.mxu0 0
    %351 = vmatprep.subr.bf16.mxu0 0
    %352 = vmatpush1.bf16.msra.mxu0 0
    %353 = vmatprep.subr.bf16.mxu0 0
    %354 = vmatpush1.bf16.msra.mxu0 0
    %355 = vmatprep.subr.bf16.mxu0 0
    %356 = vmatpush1.bf16.msra.mxu0 0
    %357 = vmatprep.subr.bf16.mxu0 0
    %358 = vmatpush1.bf16.msra.mxu0 0
    %359 = vmatprep.subr.bf16.mxu0 0
    %360 = vmatpush1.bf16.msra.mxu0 0
    %361 = vmatprep.subr.bf16.mxu0 0
    %362 = vmatpush1.bf16.msra.mxu0 0
    %363 = vmatprep.subr.bf16.mxu0 0
    %364 = vmatpush1.bf16.msra.mxu0 0
    %365 = vmatprep.mubr.bf16.mxu0 0
    %366 = vmatmul.mubr.bf16.gmra.mrb[0].mxu0 %v261
    %v367 = vpop.f32.mrb[0].mxu0
    %v368 = vadd.f32 %v283, %v367
    %v369 = vpop.f32.mrb[0].mxu0
    %v370 = vpop.f32.mrb[0].mxu0
    %v371 = vpop.f32.mrb[0].mxu0
    %372 = vdwg.mxu0
    %v373 = vmax.f32 %v368, 0.0
    %v374 = vpack.c.bf16 %v373, %v373
    %v375 = vld [vmem:[#allocation8] sm:$0xf]
    %v376 = vld [vmem:[#allocation8 + $0x4] sm:$0xf]
    %v377 = vld [vmem:[#allocation8 + $0x8] sm:$0xf]
    %v378 = vld [vmem:[#allocation8 + $0xc] sm:$0xf]
    %v379 = vld [vmem:[#allocation8 + $0x10] sm:$0xf]
    %v380 = vld [vmem:[#allocation8 + $0x14] sm:$0xf]
    %v381 = vld [vmem:[#allocation8 + $0x18] sm:$0xf]
    %v382 = vld [vmem:[#allocation8 + $0x1c] sm:$0xf]
    %v383 = vld [vmem:[#allocation8 + $0x20] sm:$0xf]
    %v384 = vld [vmem:[#allocation8 + $0x24] sm:$0xf]
    %v385 = vld [vmem:[#allocation8 + $0x28] sm:$0xf]
    %v386 = vld [vmem:[#allocation8 + $0x2c] sm:$0xf]
    %v387 = vld [vmem:[#allocation8 + $0x30] sm:$0xf]
    %v388 = vld [vmem:[#allocation8 + $0x34] sm:$0xf]
    %v389 = vld [vmem:[#allocation8 + $0x38] sm:$0xf]
    %v390 = vld [vmem:[#allocation8 + $0x3c] sm:$0xf]
    %v391 = vld [vmem:[%s6] sm:$0x1]
    %v393 = vlaneseq
    %v394 = vshrl.u32 %v393, 7
    %v395 = vsub.s32 0, %v394
    %v396 = vrot.slane %v391, %v395
    %v414 = vunpack.c.l.b16 %v375
    %v415 = vunpack.c.l.b16 %v376
    %v416 = vunpack.c.l.b16 %v377
    %v417 = vunpack.c.l.b16 %v378
    %v418 = vunpack.c.l.b16 %v379
    %v419 = vunpack.c.l.b16 %v380
    %v420 = vunpack.c.l.b16 %v381
    %v421 = vunpack.c.l.b16 %v382
    %v422 = vunpack.c.l.b16 %v383
    %v423 = vunpack.c.l.b16 %v384
    %v424 = vunpack.c.l.b16 %v385
    %v425 = vunpack.c.l.b16 %v386
    %v426 = vunpack.c.l.b16 %v387
    %v427 = vunpack.c.l.b16 %v388
    %v428 = vunpack.c.l.b16 %v389
    %v429 = vunpack.c.l.b16 %v390
    %v430 = vpack.c.b16 %v415, %v414
    %v431 = vpack.c.b16 %v417, %v416
    %v432 = vpack.c.b16 %v419, %v418
    %v433 = vpack.c.b16 %v421, %v420
    %v434 = vpack.c.b16 %v423, %v422
    %v435 = vpack.c.b16 %v425, %v424
    %v436 = vpack.c.b16 %v427, %v426
    %v437 = vpack.c.b16 %v429, %v428
    %446 = vmatprep.subr.bf16.mxu0 0
    %447 = vmatpush1.bf16.msra.mxu0 %v430
    %448 = vmatprep.subr.bf16.mxu0 0
    %449 = vmatpush1.bf16.msra.mxu0 %v431
    %450 = vmatprep.subr.bf16.mxu0 0
    %451 = vmatpush1.bf16.msra.mxu0 %v432
    %452 = vmatprep.subr.bf16.mxu0 0
    %453 = vmatpush1.bf16.msra.mxu0 %v433
    %454 = vmatprep.subr.bf16.mxu0 0
    %455 = vmatpush1.bf16.msra.mxu0 %v434
    %456 = vmatprep.subr.bf16.mxu0 0
    %457 = vmatpush1.bf16.msra.mxu0 %v435
    %458 = vmatprep.subr.bf16.mxu0 0
    %459 = vmatpush1.bf16.msra.mxu0 %v436
    %460 = vmatprep.subr.bf16.mxu0 0
    %461 = vmatpush1.bf16.msra.mxu0 %v437
    %462 = vmatprep.subr.bf16.mxu0 0
    %463 = vmatpush1.bf16.msra.mxu0 0
    %464 = vmatprep.subr.bf16.mxu0 0
    %465 = vmatpush1.bf16.msra.mxu0 0
    %466 = vmatprep.subr.bf16.mxu0 0
    %467 = vmatpush1.bf16.msra.mxu0 0
    %468 = vmatprep.subr.bf16.mxu0 0
    %469 = vmatpush1.bf16.msra.mxu0 0
    %470 = vmatprep.subr.bf16.mxu0 0
    %471 = vmatpush1.bf16.msra.mxu0 0
    %472 = vmatprep.subr.bf16.mxu0 0
    %473 = vmatpush1.bf16.msra.mxu0 0
    %474 = vmatprep.subr.bf16.mxu0 0
    %475 = vmatpush1.bf16.msra.mxu0 0
    %476 = vmatprep.subr.bf16.mxu0 0
    %477 = vmatpush1.bf16.msra.mxu0 0
    %478 = vmatprep.mubr.bf16.mxu0 0
    %479 = vmatmul.mubr.bf16.gmra.mrb[0].mxu0 %v374
    %v480 = vpop.f32.mrb[0].mxu0
    %v481 = vadd.f32 %v396, %v480
    %v482 = vpop.f32.mrb[0].mxu0
    %v483 = vpop.f32.mrb[0].mxu0
    %v484 = vpop.f32.mrb[0].mxu0
    %485 = vdwg.mxu0
    %v486 = vxor.u32 %v481, 2147483648
    %v487 = vmul.f32 %v486, 1.442695
    %v488 = vpow.pop %v487
    %v489 = vadd.f32 %v488, 1.0
    %v490 = vrcp.pop %v489
    %v491 = vmul.f32 1.0, %v490
    %492 = vst [vmem:[#allocation10] sm:$0xff] %v491
    // Predicated region
    $region46: #{tpu_custom_call.1} parent=1 // pred_check
      _
    $region47: #{tpu_custom_call.1} parent=1 // pred_check_branch
      %494 = sbr.rel (0) target = $region49
    $region48: #{tpu_custom_call.1} parent=1 // pred_region
      %s496 = ssub.s32 128, 128
      %497 = vsyncadd [#allocation4], %s496
      %s499 = sshll.u32 [#allocation10], 4
      %s500 = int_to_ptr.vmem [resolvable:$true] %s499
      %502 = dma.vmem_to_hbm [thread:$0]  %s500, 128, %s7, [#allocation4]
    $region49: #{tpu_custom_call.1} parent=1 // pred_fallthru
      _
    // Predicated region
    $region50: #{tpu_custom_call.1} parent=1 // pred_check
      _
    $region51: #{tpu_custom_call.1} parent=1 // pred_check_branch
      %504 = sbr.rel (0) target = $region53
    $region52: #{tpu_custom_call.1} parent=1 // pred_region
      %505 = dma.done [#allocation4], 128
    $region53: #{tpu_custom_call.1} parent=1 // pred_fallthru
      _
    %506 = vsyncpa [#allocation3], 1
    %507 = vsyncpa [#allocation6], 1
    %508 = vsyncpa [#allocation9], 1
    %509 = vsyncpa [#allocation4], 1

</llo_original>
